<compile_context>
chip_gen: v7x
topology: tpu7x:2x2x1
jax: 0.10.0
libtpu: 0.0.40
codegen_flags: <defaults>
</compile_context>

<pallas_src>
import math

import jax
import jax.numpy as jnp
from jax.experimental import pallas as pl
from jax.experimental.pallas import tpu as pltpu


def _round_up(n, m):
    return ((n + m - 1) // m) * m


def _nbytes(shape, dtype):
    return math.prod(shape) * jnp.dtype(dtype).itemsize


def trunk_kernel(x_ref, w1_ref, b1_ref, w2_ref, b2_ref, o_ref):
    """Fused fc1 -> leaky_relu(0.2) -> fc2 -> leaky_relu(0.2) on one row tile."""
    # fc1: MXU matmul with f32 accumulation; bias broadcast-added on the VPU.
    h = jnp.dot(x_ref[...], w1_ref[...], preferred_element_type=jnp.float32)
    h = h + b1_ref[...].astype(jnp.float32)
    h = jnp.maximum(h, 0.2 * h)                       # leaky_relu(0.2)
    # fc2: cast back to the weight dtype so bf16 weights take the fast MXU path.
    y = jnp.dot(h.astype(w2_ref.dtype), w2_ref[...],
                preferred_element_type=jnp.float32)
    y = y + b2_ref[...].astype(jnp.float32)
    y = jnp.maximum(y, 0.2 * y)                       # leaky_relu(0.2)
    o_ref[...] = y.astype(o_ref.dtype)


def _pack_pair_blockdiag(w):
    """(in, out) -> (2*in, 2*out) block-diagonal [[w, 0], [0, w]]."""
    i, o = w.shape
    z = jnp.zeros((i, o), w.dtype)
    top = jnp.concatenate([w, z], axis=1)
    bot = jnp.concatenate([z, w], axis=1)
    return jnp.concatenate([top, bot], axis=0)


def trunk_forward(x, w1, b1, w2, b2):
    """Forward pass of Trunk.

    x: (B, ...) flattened to (B, obs) like torch.flatten(start_dim=1).
    w1: (obs, H1), b1: (H1,) or (1, H1);  w2: (H1, H2), b2: (H2,) or (1, H2).
    """
    B = x.shape[0]
    xf = x.reshape(B, -1)
    obs = xf.shape[1]
    H1, H2 = w1.shape[1], w2.shape[1]

    out_dtype = jnp.result_type(x.dtype, w1.dtype)
    x_item = jnp.dtype(xf.dtype).itemsize
    o_item = jnp.dtype(out_dtype).itemsize
    w_item = jnp.dtype(w1.dtype).itemsize

    # ---- lane-dense packing decision -------------------------------------
    # Pair-packing makes every kernel tensor 128 lanes wide (unmasked stores),
    # at the cost of doubling the (tiny) weight bytes.  Only do it while the
    # doubled weights still comfortably fit in VMEM and it is actually needed.
    packed_w_bytes = ((2 * obs) * (2 * H1) + (2 * H1) * (2 * H2)
                      + 2 * H1 + 2 * H2) * w_item
    pack = 2 if (H2 % 128 != 0 and B >= 2
                 and packed_w_bytes <= 12 * 1024 * 1024) else 1
    # TODO(synk): for very large obs (weights exceeding VMEM) a K-tiled grid
    # would be required; this wrapper assumes the weight matrices fit in VMEM.

    if pack == 2:
        in_dim, h1_dim, h2_dim = 2 * obs, 2 * H1, 2 * H2
        W1 = _pack_pair_blockdiag(w1)
        W2 = _pack_pair_blockdiag(w2)
        B1 = jnp.concatenate([b1.reshape(1, H1)] * 2, axis=-1)
        B2 = jnp.concatenate([b2.reshape(1, H2)] * 2, axis=-1)
    else:
        in_dim, h1_dim, h2_dim = obs, H1, H2
        W1, W2 = w1, w2
        B1, B2 = b1.reshape(1, H1), b2.reshape(1, H2)

    rows_needed = pl.cdiv(B, pack)

    # ---- row-tile size: ~4 MiB activation tiles, minimal batch padding ----
    target_tile_bytes = 4 * 1024 * 1024
    tbr_max = (target_tile_bytes // (in_dim * x_item)) // 8 * 8
    tbr_max = max(8, min(1024, tbr_max))
    num_tiles = pl.cdiv(rows_needed, tbr_max)
    tbr = _round_up(pl.cdiv(rows_needed, num_tiles), 8)
    rows = num_tiles * tbr
    Bp = pack * rows

    if Bp != B:
        xf = jnp.pad(xf, ((0, Bp - B), (0, 0)))
    xp = xf.reshape(rows, in_dim)      # row-major => free pairing of batch rows

    # ---- VMEM budget: double-buffered tiles + resident weights ------------
    w_bytes = (_nbytes(W1.shape, W1.dtype) + _nbytes(B1.shape, B1.dtype)
               + _nbytes(W2.shape, W2.dtype) + _nbytes(B2.shape, B2.dtype))
    need = (2 * (tbr * in_dim * x_item + tbr * h2_dim * o_item)
            + 2 * w_bytes + (2 << 20))
    vmem_limit = int(min(max(need, 16 * 1024 * 1024), 48 * 1024 * 1024))

    cost = pl.CostEstimate(
        flops=2 * rows * (in_dim * h1_dim + h1_dim * h2_dim),
        transcendentals=0,
        bytes_accessed=(_nbytes(xp.shape, xp.dtype) + w_bytes
                        + _nbytes((rows, h2_dim), out_dtype)),
    )

    out_p = pl.pallas_call(
        trunk_kernel,
        out_shape=jax.ShapeDtypeStruct((rows, h2_dim), out_dtype),
        grid=(num_tiles,),
        in_specs=[
            pl.BlockSpec((tbr, in_dim), lambda i: (i, 0)),      # streamed rows
            pl.BlockSpec((in_dim, h1_dim), lambda i: (0, 0)),   # resident weights
            pl.BlockSpec((1, h1_dim), lambda i: (0, 0)),
            pl.BlockSpec((h1_dim, h2_dim), lambda i: (0, 0)),
            pl.BlockSpec((1, h2_dim), lambda i: (0, 0)),
        ],
        out_specs=pl.BlockSpec((tbr, h2_dim), lambda i: (i, 0)),
        compiler_params=pltpu.CompilerParams(
            dimension_semantics=("parallel",),   # v7x: row tiles split over 2 TCs
            vmem_limit_bytes=vmem_limit,
        ),
        cost_estimate=cost,
    )(xp, W1, B1, W2, B2)

    # (rows, pack*H2) -> (Bp, H2) is a free row-major reshape; drop padding.
    return out_p.reshape(Bp, H2)[:B]


def init_params(key, obs_size, hidden=64, dtype=jnp.float32):
    """Mimics nn.Linear default init (uniform +/- 1/sqrt(fan_in)); weights stored (in, out)."""
    k1, k2, k3, k4 = jax.random.split(key, 4)
    bound1 = 1.0 / math.sqrt(obs_size)
    bound2 = 1.0 / math.sqrt(hidden)
    w1 = jax.random.uniform(k1, (obs_size, hidden), jnp.float32, -bound1, bound1).astype(dtype)
    b1 = jax.random.uniform(k2, (hidden,), jnp.float32, -bound1, bound1).astype(dtype)
    w2 = jax.random.uniform(k3, (hidden, hidden), jnp.float32, -bound2, bound2).astype(dtype)
    b2 = jax.random.uniform(k4, (hidden,), jnp.float32, -bound2, bound2).astype(dtype)
    return w1, b1, w2, b2


if __name__ == "__main__":
    key = jax.random.PRNGKey(0)
    k_x, k_p = jax.random.split(key)

    # Small NCHW-style observation: batch=2, channels=4, spatial=4x2 -> obs=32.
    x = jax.random.normal(k_x, (2, 4, 4, 2), dtype=jnp.float32)
    obs_size = 4 * 4 * 2

    w1, b1, w2, b2 = init_params(k_p, obs_size, hidden=64)

    trunk = jax.jit(trunk_forward)
    out = jax.block_until_ready(trunk(x, w1, b1, w2, b2))

    # Reference check in plain JAX (same math as the PyTorch module).
    xf = x.reshape(x.shape[0], -1)
    h_ref = xf @ w1 + b1
    h_ref = jnp.where(h_ref >= 0, h_ref, 0.2 * h_ref)
    y_ref = h_ref @ w2 + b2
    y_ref = jnp.where(y_ref >= 0, y_ref, 0.2 * y_ref)

    assert out.shape == (2, 64)
    assert jnp.allclose(out, y_ref, atol=1e-4, rtol=1e-4)

    print("KERNEL_OK")
</pallas_src>

<mosaic_0001>
module attributes {stable_mosaic.version = 11 : i64} {
  func.func @trunk_kernel(%arg0: i32, %arg1: memref<8x64xf32, #tpu.memory_space<vmem>>, %arg2: memref<64x128xf32, #tpu.memory_space<vmem>>, %arg3: memref<1x128xf32, #tpu.memory_space<vmem>>, %arg4: memref<128x128xf32, #tpu.memory_space<vmem>>, %arg5: memref<1x128xf32, #tpu.memory_space<vmem>>, %arg6: memref<8x128xf32, #tpu.memory_space<vmem>>) attributes {dimension_semantics = [#tpu.dimension_semantics<parallel>], iteration_bounds = array<i64: 1>, scalar_prefetch = 0 : i64, scratch_operands = 0 : i64, tpu.core_type = #tpu.core_type<tc>, window_params = [{transform_indices = @transform_0, window_bounds = array<i64: 8, 64>}, {pipeline_mode = #tpu.pipeline_mode<synchronous>, transform_indices = @transform_1, window_bounds = array<i64: 64, 128>}, {pipeline_mode = #tpu.pipeline_mode<synchronous>, transform_indices = @transform_2, window_bounds = array<i64: 1, 128>}, {pipeline_mode = #tpu.pipeline_mode<synchronous>, transform_indices = @transform_3, window_bounds = array<i64: 128, 128>}, {pipeline_mode = #tpu.pipeline_mode<synchronous>, transform_indices = @transform_4, window_bounds = array<i64: 1, 128>}, {transform_indices = @transform_5, window_bounds = array<i64: 8, 128>}]} {
    %c0 = arith.constant 0 : index
    %c0_0 = arith.constant 0 : index
    %0 = vector.load %arg1[%c0, %c0_0] : memref<8x64xf32, #tpu.memory_space<vmem>>, vector<8x64xf32>
    %c0_1 = arith.constant 0 : index
    %c0_2 = arith.constant 0 : index
    %1 = vector.load %arg2[%c0_1, %c0_2] : memref<64x128xf32, #tpu.memory_space<vmem>>, vector<64x128xf32>
    %cst = arith.constant dense<0.000000e+00> : vector<8x128xf32>
    %2 = tpu.matmul %0, %1, %cst {dimension_numbers = #tpu.dot_dimension_numbers<[1], [0], [0], [1], [0, 0, 1, 1], [], []>} : vector<8x64xf32>, vector<64x128xf32>, vector<8x128xf32> -> vector<8x128xf32>
    %c0_3 = arith.constant 0 : index
    %c0_4 = arith.constant 0 : index
    %3 = vector.load %arg3[%c0_3, %c0_4] : memref<1x128xf32, #tpu.memory_space<vmem>>, vector<1x128xf32>
    %4 = vector.broadcast %3 : vector<1x128xf32> to vector<8x128xf32>
    %5 = arith.addf %2, %4 : vector<8x128xf32>
    %cst_5 = arith.constant 2.000000e-01 : f32
    %6 = vector.broadcast %cst_5 : f32 to vector<8x128xf32>
    %7 = arith.mulf %6, %5 : vector<8x128xf32>
    %8 = arith.maximumf %5, %7 : vector<8x128xf32>
    %c0_6 = arith.constant 0 : index
    %c0_7 = arith.constant 0 : index
    %9 = vector.load %arg4[%c0_6, %c0_7] : memref<128x128xf32, #tpu.memory_space<vmem>>, vector<128x128xf32>
    %cst_8 = arith.constant dense<0.000000e+00> : vector<8x128xf32>
    %10 = tpu.matmul %8, %9, %cst_8 {dimension_numbers = #tpu.dot_dimension_numbers<[1], [0], [0], [1], [0, 0, 1, 1], [], []>} : vector<8x128xf32>, vector<128x128xf32>, vector<8x128xf32> -> vector<8x128xf32>
    %c0_9 = arith.constant 0 : index
    %c0_10 = arith.constant 0 : index
    %11 = vector.load %arg5[%c0_9, %c0_10] : memref<1x128xf32, #tpu.memory_space<vmem>>, vector<1x128xf32>
    %12 = vector.broadcast %11 : vector<1x128xf32> to vector<8x128xf32>
    %13 = arith.addf %10, %12 : vector<8x128xf32>
    %cst_11 = arith.constant 2.000000e-01 : f32
    %14 = vector.broadcast %cst_11 : f32 to vector<8x128xf32>
    %15 = arith.mulf %14, %13 : vector<8x128xf32>
    %16 = arith.maximumf %13, %15 : vector<8x128xf32>
    %c0_12 = arith.constant 0 : index
    %c0_13 = arith.constant 0 : index
    %17 = vector.load %arg6[%c0_12, %c0_13] : memref<8x128xf32, #tpu.memory_space<vmem>>, vector<8x128xf32>
    tpu.vector_store %arg6[%c0_12, %c0_13], %16 {strides = array<i32>} : memref<8x128xf32, #tpu.memory_space<vmem>>, vector<8x128xf32>,
    return
  }
  func.func @transform_0(%arg0: i32) -> (i32, i32) {
    %c0_i32 = arith.constant 0 : i32
    %c0_i32_0 = arith.constant 0 : i32
    return %arg0, %c0_i32 : i32, i32
  }
  func.func @transform_1(%arg0: i32) -> (i32, i32) {
    %c0_i32 = arith.constant 0 : i32
    %c0_i32_0 = arith.constant 0 : i32
    %c0_i32_1 = arith.constant 0 : i32
    return %c0_i32, %c0_i32_0 : i32, i32
  }
  func.func @transform_2(%arg0: i32) -> (i32, i32) {
    %c0_i32 = arith.constant 0 : i32
    %c0_i32_0 = arith.constant 0 : i32
    %c0_i32_1 = arith.constant 0 : i32
    return %c0_i32, %c0_i32_0 : i32, i32
  }
  func.func @transform_3(%arg0: i32) -> (i32, i32) {
    %c0_i32 = arith.constant 0 : i32
    %c0_i32_0 = arith.constant 0 : i32
    %c0_i32_1 = arith.constant 0 : i32
    return %c0_i32, %c0_i32_0 : i32, i32
  }
  func.func @transform_4(%arg0: i32) -> (i32, i32) {
    %c0_i32 = arith.constant 0 : i32
    %c0_i32_0 = arith.constant 0 : i32
    %c0_i32_1 = arith.constant 0 : i32
    return %c0_i32, %c0_i32_0 : i32, i32
  }
  func.func @transform_5(%arg0: i32) -> (i32, i32) {
    %c0_i32 = arith.constant 0 : i32
    %c0_i32_0 = arith.constant 0 : i32
    return %arg0, %c0_i32 : i32, i32
  }
}

</mosaic_0001>

<llo_original>
// kernel: trunk_forward.1
$region0: #{trunk_forward.1}
  #allocation0 [shape = 'u32[]', space=smem, size = 0x4, offset = 0x4, fixed_abs, tag = 'smem constant byte address 0x4 - core index']
  #allocation1 [shape = 'u32[144,128]{1,0:T(1,128)}', space=vmem, size = 0x12000, scoped, tag = 'internal scratch']
  %s0 = inlined_call_operand.vmem [shape: f32[8,64], index: 0, kind: input, shape index: {}]
  %s1 = inlined_call_operand.vmem [shape: f32[64,128], index: 1, kind: input, shape index: {}]
  %s2 = inlined_call_operand.vmem [shape: f32[1,128], index: 2, kind: input, shape index: {}]
  %s3 = inlined_call_operand.vmem [shape: f32[128,128], index: 3, kind: input, shape index: {}]
  %s4 = inlined_call_operand.vmem [shape: f32[1,128], index: 4, kind: input, shape index: {}]
  %s5 = inlined_call_operand.vmem [shape: f32[8,128], index: 5, kind: output, shape index: {}]
  %s6 = sld [smem:[#allocation0]]
  $region30: #{trunk_forward.1} parent=0
    _
  %s8 = ssub.s32 1, %s6
  %s9 = scalar_select 0, %s8, %s6
  // Predicated region
  $region2: #{trunk_forward.1} parent=0 // pred_check
    _
  $region3: #{trunk_forward.1} parent=0 // pred_check_branch
    %11 = sbr.rel (0) target = $region5
  $region4: #{trunk_forward.1} parent=0 // pred_region
    _
  $region5: #{trunk_forward.1} parent=0 // pred_fallthru
    _
  // Predicated region
  $region6: #{trunk_forward.1} parent=0 // pred_check
    _
  $region7: #{trunk_forward.1} parent=0 // pred_check_branch
    %13 = sbr.rel (0) target = $region9
  $region8: #{trunk_forward.1} parent=0 // pred_region
    _
  $region9: #{trunk_forward.1} parent=0 // pred_fallthru
    _
  // Predicated region
  $region10: #{trunk_forward.1} parent=0 // pred_check
    _
  $region11: #{trunk_forward.1} parent=0 // pred_check_branch
    %15 = sbr.rel (0) target = $region13
  $region12: #{trunk_forward.1} parent=0 // pred_region
    _
  $region13: #{trunk_forward.1} parent=0 // pred_fallthru
    _
  // Predicated region
  $region14: #{trunk_forward.1} parent=0 // pred_check
    _
  $region15: #{trunk_forward.1} parent=0 // pred_check_branch
    %17 = sbr.rel (0) target = $region17
  $region16: #{trunk_forward.1} parent=0 // pred_region
    _
  $region17: #{trunk_forward.1} parent=0 // pred_fallthru
    _
  // Predicated region
  $region18: #{trunk_forward.1} parent=0 // pred_check
    _
  $region19: #{trunk_forward.1} parent=0 // pred_check_branch
    %19 = sbr.rel (0) target = $region21
  $region20: #{trunk_forward.1} parent=0 // pred_region
    _
  $region21: #{trunk_forward.1} parent=0 // pred_fallthru
    _
  %v20 = vld [vmem:[%s0] sm:$0xff]
  %v21 = vld [vmem:[%s1] sm:$0xff]
  %v22 = vld [vmem:[%s1 + $0x8] sm:$0xff]
  %v23 = vld [vmem:[%s1 + $0x10] sm:$0xff]
  %v24 = vld [vmem:[%s1 + $0x18] sm:$0xff]
  %v25 = vld [vmem:[%s1 + $0x20] sm:$0xff]
  %v26 = vld [vmem:[%s1 + $0x28] sm:$0xff]
  %v27 = vld [vmem:[%s1 + $0x30] sm:$0xff]
  %v28 = vld [vmem:[%s1 + $0x38] sm:$0xff]
  %v29 = vld [vmem:[%s2] sm:$0x1]
  %v31 = vlaneseq
  %v32 = vshrl.u32 %v31, 7
  %v33 = vsub.s32 0, %v32
  %v34 = vrot.slane %v29, %v33
  %vm36 = vcmask 523264
  %v38 = vsel %vm36, %v20, 0
  %40 = vmatprep.subr.mxu0 0.0
  %41 = vmatpush1.msra.mxu0 %v21
  %42 = vmatprep.subr.mxu0 0.0
  %43 = vmatpush1.msra.mxu0 %v22
  %44 = vmatprep.subr.mxu0 0.0
  %45 = vmatpush1.msra.mxu0 %v23
  %46 = vmatprep.subr.mxu0 0.0
  %47 = vmatpush1.msra.mxu0 %v24
  %48 = vmatprep.subr.mxu0 0.0
  %49 = vmatpush1.msra.mxu0 %v25
  %50 = vmatprep.subr.mxu0 0.0
  %51 = vmatpush1.msra.mxu0 %v26
  %52 = vmatprep.subr.mxu0 0.0
  %53 = vmatpush1.msra.mxu0 %v27
  %54 = vmatprep.subr.mxu0 0.0
  %55 = vmatpush1.msra.mxu0 %v28
  %56 = vmatprep.subr.mxu0 0.0
  %57 = vmatpush1.msra.mxu0 0.0
  %58 = vmatprep.subr.mxu0 0.0
  %59 = vmatpush1.msra.mxu0 0.0
  %60 = vmatprep.subr.mxu0 0.0
  %61 = vmatpush1.msra.mxu0 0.0
  %62 = vmatprep.subr.mxu0 0.0
  %63 = vmatpush1.msra.mxu0 0.0
  %64 = vmatprep.subr.mxu0 0.0
  %65 = vmatpush1.msra.mxu0 0.0
  %66 = vmatprep.subr.mxu0 0.0
  %67 = vmatpush1.msra.mxu0 0.0
  %68 = vmatprep.subr.mxu0 0.0
  %69 = vmatpush1.msra.mxu0 0.0
  %70 = vmatprep.subr.mxu0 0.0
  %71 = vmatpush1.msra.mxu0 0.0
  %72 = vmatprep.subr.mxu0 0.0
  %73 = vmatpush1.msra.mxu0 0.0
  %74 = vmatprep.subr.mxu0 0.0
  %75 = vmatpush1.msra.mxu0 0.0
  %76 = vmatprep.subr.mxu0 0.0
  %77 = vmatpush1.msra.mxu0 0.0
  %78 = vmatprep.subr.mxu0 0.0
  %79 = vmatpush1.msra.mxu0 0.0
  %80 = vmatprep.subr.mxu0 0.0
  %81 = vmatpush1.msra.mxu0 0.0
  %82 = vmatprep.subr.mxu0 0.0
  %83 = vmatpush1.msra.mxu0 0.0
  %84 = vmatprep.subr.mxu0 0.0
  %85 = vmatpush1.msra.mxu0 0.0
  %86 = vmatprep.subr.mxu0 0.0
  %87 = vmatpush1.msra.mxu0 0.0
  %88 = vmatprep.subr.mxu0 0.0
  %89 = vmatpush1.msra.mxu0 0.0
  %90 = vmatprep.subr.mxu0 0.0
  %91 = vmatpush1.msra.mxu0 0.0
  %92 = vmatprep.subr.mxu0 0.0
  %93 = vmatpush1.msra.mxu0 0.0
  %94 = vmatprep.subr.mxu0 0.0
  %95 = vmatpush1.msra.mxu0 0.0
  %96 = vmatprep.subr.mxu0 0.0
  %97 = vmatpush1.msra.mxu0 0.0
  %98 = vmatprep.subr.mxu0 0.0
  %99 = vmatpush1.msra.mxu0 0.0
  %100 = vmatprep.subr.mxu0 0.0
  %101 = vmatpush1.msra.mxu0 0.0
  %102 = vmatprep.subr.mxu0 0.0
  %103 = vmatpush1.msra.mxu0 0.0
  %104 = vmatprep.mubr.f32.mxu0 0.0
  %105 = vmatmul.mubr.f32.gmra.mrb[0].mxu0 %v38
  %v106 = vpop.f32.mrb[0].mxu0
  %v107 = vadd.f32 %v34, %v106
  %v108 = vpop.f32.mrb[0].mxu0
  %109 = vdwg.mxu0
  %v110 = vmul.f32 %v107, 0.2
  %v111 = vmax.f32 %v107, %v110
  %v112 = vld [vmem:[%s3] sm:$0xff]
  %v113 = vld [vmem:[%s3 + $0x8] sm:$0xff]
  %v114 = vld [vmem:[%s3 + $0x10] sm:$0xff]
  %v115 = vld [vmem:[%s3 + $0x18] sm:$0xff]
  %v116 = vld [vmem:[%s3 + $0x20] sm:$0xff]
  %v117 = vld [vmem:[%s3 + $0x28] sm:$0xff]
  %v118 = vld [vmem:[%s3 + $0x30] sm:$0xff]
  %v119 = vld [vmem:[%s3 + $0x38] sm:$0xff]
  %v120 = vld [vmem:[%s3 + $0x40] sm:$0xff]
  %v121 = vld [vmem:[%s3 + $0x48] sm:$0xff]
  %v122 = vld [vmem:[%s3 + $0x50] sm:$0xff]
  %v123 = vld [vmem:[%s3 + $0x58] sm:$0xff]
  %v124 = vld [vmem:[%s3 + $0x60] sm:$0xff]
  %v125 = vld [vmem:[%s3 + $0x68] sm:$0xff]
  %v126 = vld [vmem:[%s3 + $0x70] sm:$0xff]
  %v127 = vld [vmem:[%s3 + $0x78] sm:$0xff]
  %v128 = vld [vmem:[%s4] sm:$0x1]
  %v130 = vlaneseq
  %v131 = vshrl.u32 %v130, 7
  %v132 = vsub.s32 0, %v131
  %v133 = vrot.slane %v128, %v132
  %135 = vmatprep.subr.mxu0 0.0
  %136 = vmatpush1.msra.mxu0 %v112
  %137 = vmatprep.subr.mxu0 0.0
  %138 = vmatpush1.msra.mxu0 %v113
  %139 = vmatprep.subr.mxu0 0.0
  %140 = vmatpush1.msra.mxu0 %v114
  %141 = vmatprep.subr.mxu0 0.0
  %142 = vmatpush1.msra.mxu0 %v115
  %143 = vmatprep.subr.mxu0 0.0
  %144 = vmatpush1.msra.mxu0 %v116
  %145 = vmatprep.subr.mxu0 0.0
  %146 = vmatpush1.msra.mxu0 %v117
  %147 = vmatprep.subr.mxu0 0.0
  %148 = vmatpush1.msra.mxu0 %v118
  %149 = vmatprep.subr.mxu0 0.0
  %150 = vmatpush1.msra.mxu0 %v119
  %151 = vmatprep.subr.mxu0 0.0
  %152 = vmatpush1.msra.mxu0 %v120
  %153 = vmatprep.subr.mxu0 0.0
  %154 = vmatpush1.msra.mxu0 %v121
  %155 = vmatprep.subr.mxu0 0.0
  %156 = vmatpush1.msra.mxu0 %v122
  %157 = vmatprep.subr.mxu0 0.0
  %158 = vmatpush1.msra.mxu0 %v123
  %159 = vmatprep.subr.mxu0 0.0
  %160 = vmatpush1.msra.mxu0 %v124
  %161 = vmatprep.subr.mxu0 0.0
  %162 = vmatpush1.msra.mxu0 %v125
  %163 = vmatprep.subr.mxu0 0.0
  %164 = vmatpush1.msra.mxu0 %v126
  %165 = vmatprep.subr.mxu0 0.0
  %166 = vmatpush1.msra.mxu0 %v127
  %167 = vmatprep.subr.mxu0 0.0
  %168 = vmatpush1.msra.mxu0 0.0
  %169 = vmatprep.subr.mxu0 0.0
  %170 = vmatpush1.msra.mxu0 0.0
  %171 = vmatprep.subr.mxu0 0.0
  %172 = vmatpush1.msra.mxu0 0.0
  %173 = vmatprep.subr.mxu0 0.0
  %174 = vmatpush1.msra.mxu0 0.0
  %175 = vmatprep.subr.mxu0 0.0
  %176 = vmatpush1.msra.mxu0 0.0
  %177 = vmatprep.subr.mxu0 0.0
  %178 = vmatpush1.msra.mxu0 0.0
  %179 = vmatprep.subr.mxu0 0.0
  %180 = vmatpush1.msra.mxu0 0.0
  %181 = vmatprep.subr.mxu0 0.0
  %182 = vmatpush1.msra.mxu0 0.0
  %183 = vmatprep.subr.mxu0 0.0
  %184 = vmatpush1.msra.mxu0 0.0
  %185 = vmatprep.subr.mxu0 0.0
  %186 = vmatpush1.msra.mxu0 0.0
  %187 = vmatprep.subr.mxu0 0.0
  %188 = vmatpush1.msra.mxu0 0.0
  %189 = vmatprep.subr.mxu0 0.0
  %190 = vmatpush1.msra.mxu0 0.0
  %191 = vmatprep.subr.mxu0 0.0
  %192 = vmatpush1.msra.mxu0 0.0
  %193 = vmatprep.subr.mxu0 0.0
  %194 = vmatpush1.msra.mxu0 0.0
  %195 = vmatprep.subr.mxu0 0.0
  %196 = vmatpush1.msra.mxu0 0.0
  %197 = vmatprep.subr.mxu0 0.0
  %198 = vmatpush1.msra.mxu0 0.0
  %199 = vmatprep.mubr.f32.mxu0 0.0
  %200 = vmatmul.mubr.f32.gmra.mrb[0].mxu0 %v111
  %v201 = vpop.f32.mrb[0].mxu0
  %v202 = vadd.f32 %v133, %v201
  %v203 = vpop.f32.mrb[0].mxu0
  %204 = vdwg.mxu0
  %v205 = vmul.f32 %v202, 0.2
  %v206 = vmax.f32 %v202, %v205
  %207 = vst [vmem:[%s5] sm:$0xff] %v206
  // Predicated region
  $region22: #{trunk_forward.1} parent=0 // pred_check
    _
  $region23: #{trunk_forward.1} parent=0 // pred_check_branch
    %209 = sbr.rel (0) target = $region25
  $region24: #{trunk_forward.1} parent=0 // pred_region
    _
  $region25: #{trunk_forward.1} parent=0 // pred_fallthru
    _
  // Predicated region
  $region26: #{trunk_forward.1} parent=0 // pred_check
    _
  $region27: #{trunk_forward.1} parent=0 // pred_check_branch
    %211 = sbr.rel (0) target = $region29
  $region28: #{trunk_forward.1} parent=0 // pred_region
    _
  $region29: #{trunk_forward.1} parent=0 // pred_fallthru
    _

</llo_original>
